<compile_context>
chip_gen: v7x
topology: tpu7x:2x2x1
jax: 0.10.0
libtpu: 0.0.40
codegen_flags: <defaults>
</compile_context>

<pallas_src>
import functools

import numpy as np

import jax
import jax.numpy as jnp
from jax.experimental import pallas as pl
from jax.experimental.pallas import tpu as pltpu


def _span_offsets(T):
    """off[s] = first packed row for start index s (Python ints, trace-time)."""
    return [s * T - (s * (s - 1)) // 2 for s in range(T)]


def _span_indices(T):
    """Vectorized (s_idx, e_idx) int32 index vectors for the packed layout."""
    lens = np.arange(T, 0, -1)                        # row lengths T, T-1, ..., 1
    s_idx = np.repeat(np.arange(T), lens)             # (P,)
    off = np.concatenate(([0], np.cumsum(lens)))[:-1]
    e_idx = np.arange(int(lens.sum())) - off[s_idx] + s_idx
    return s_idx.astype(np.int32), e_idx.astype(np.int32)


def _span_pack_kernel(embA_ref, embB_ref, wA_ref, bA_ref, wB_ref,
                      out_ref, hA_s, hB_s, *, T):
    # Fused projections (MXU, f32 accumulation), once per batch element.
    hA = jnp.dot(embA_ref[...], wA_ref[...],
                 preferred_element_type=jnp.float32) + bA_ref[...]
    hB = jnp.dot(embB_ref[...], wB_ref[...],
                 preferred_element_type=jnp.float32)
    hA_s[...] = hA.astype(hA_s.dtype)    # bf16 staging when activations are bf16
    hB_s[...] = hB.astype(hB_s.dtype)

    # Static triangular fill of the packed (P, H) output block:
    #   out[off(s) + j, :] = hA[s, :] + hB[s + j, :]   for j in [0, T - s)
    # All offsets / lengths are Python ints -> static shapes, no dynamic-length
    # copies; the pipeline writes the whole block as one contiguous HBM DMA.
    offs = _span_offsets(T)
    for s in range(T):
        L = T - s
        row_a = hA_s[pl.ds(s, 1), :]      # (1, H)
        rows_b = hB_s[pl.ds(s, L), :]     # (L, H)
        out_ref[pl.ds(offs[s], L), :] = (row_a + rows_b).astype(out_ref.dtype)


def _vmem_plan(T, EA, EB, H, P, emb_isz, w_isz, out_isz, scr_isz):
    """Dtype-aware VMEM estimate + chip-aware vmem_limit_bytes."""
    dbl = 2                                            # pipeline double-buffering
    out_block = dbl * P * H * out_isz                  # packed output block
    in_blocks = dbl * T * (EA + EB) * emb_isz          # per-batch emb blocks
    weights = dbl * ((EA + EB) * H + H) * w_isz        # W_A, W_B, b_A (invariant)
    scratch = 2 * T * H * scr_isz                      # hA / hB staging
    needed = out_block + in_blocks + weights + scratch
    try:
        capacity = int(pltpu.get_tpu_info().vmem_capacity_bytes)
    except Exception:
        capacity = 64 << 20                            # v7x-conservative fallback
    limit = int(min(max(needed * 5 // 4 + (4 << 20), 32 << 20),
                    (capacity * 3) // 4))              # ~96 MiB v5e/v6e, ~48 MiB v7x
    return needed <= limit, limit


def span_rep_assembly(embA, embB, maskA, maskB, wA, bA, wB):
    B, T, EA = embA.shape
    _, _, EB = embB.shape
    H = wA.shape[1]
    P = T * (T + 1) // 2

    out_dtype = embA.dtype
    # bf16 activations -> bf16 staging/adds (v6e/v7x bf16 VALU, halves bytes);
    # otherwise exact f32 path.
    scratch_dtype = jnp.bfloat16 if embA.dtype == jnp.bfloat16 else jnp.float32

    fits, vmem_limit = _vmem_plan(
        T, EA, EB, H, P,
        emb_isz=np.dtype(embA.dtype).itemsize,
        w_isz=np.dtype(wA.dtype).itemsize,
        out_isz=np.dtype(out_dtype).itemsize,
        scr_isz=np.dtype(scratch_dtype).itemsize)

    s_idx, e_idx = _span_indices(T)
    mask = (maskA.astype(jnp.float32)[:, s_idx]
            * maskB.astype(jnp.float32)[:, e_idx])

    if not fits:
        # TODO(synk): for very large T*H the per-batch packed block exceeds
        # VMEM; a chunked-start-axis kernel variant is needed there. Fall back
        # to plain XLA (still packed, no rect) so results stay correct.
        hA = jnp.einsum("bte,eh->bth", embA, wA,
                        preferred_element_type=jnp.float32) + bA
        hB = jnp.einsum("bte,eh->bth", embB, wB,
                        preferred_element_type=jnp.float32)
        combined = (hA[:, s_idx, :] + hB[:, e_idx, :]).astype(out_dtype)
        return combined, mask

    kernel = functools.partial(_span_pack_kernel, T=T)
    bA2 = bA.reshape(1, H)

    combined = pl.pallas_call(
        kernel,
        out_shape=jax.ShapeDtypeStruct((B, P, H), out_dtype),
        grid_spec=pltpu.PrefetchScalarGridSpec(
            num_scalar_prefetch=0,
            grid=(B,),
            in_specs=[
                pl.BlockSpec((None, T, EA), lambda b: (b, 0, 0)),   # embA[b]
                pl.BlockSpec((None, T, EB), lambda b: (b, 0, 0)),   # embB[b]
                pl.BlockSpec((EA, H), lambda b: (0, 0)),            # W_A (invariant)
                pl.BlockSpec((1, H), lambda b: (0, 0)),             # b_A (invariant)
                pl.BlockSpec((EB, H), lambda b: (0, 0)),            # W_B (invariant)
            ],
            out_specs=pl.BlockSpec((None, P, H), lambda b: (b, 0, 0)),
            scratch_shapes=[
                pltpu.VMEM((T, H), scratch_dtype),   # hA staging
                pltpu.VMEM((T, H), scratch_dtype),   # hB staging
            ],
        ),
        compiler_params=pltpu.CompilerParams(
            dimension_semantics=("parallel",),       # batch shards across cores
            vmem_limit_bytes=vmem_limit,
        ),
    )(embA, embB, wA, bA2, wB)

    return combined, mask


def _reference(embA, embB, maskA, maskB, wA, bA, wB):
    """Pure-JAX reference mirroring the PyTorch forward."""
    hA = jnp.einsum("bte,eh->bth", embA, wA) + bA
    hB = jnp.einsum("bte,eh->bth", embB, wB)
    s_idx, e_idx = _span_indices(embA.shape[1])
    combined = hA[:, s_idx, :] + hB[:, e_idx, :]
    mask = (maskA.astype(jnp.float32)[:, s_idx]
            * maskB.astype(jnp.float32)[:, e_idx])
    return combined, mask


if __name__ == "__main__":
    B, T = 2, 8
    EA, EB, H = 48, 64, 32

    key = jax.random.PRNGKey(0)
    k1, k2, k3, k4, k5, k6, k7 = jax.random.split(key, 7)

    embA = jax.random.normal(k1, (B, T, EA), dtype=jnp.float32)
    embB = jax.random.normal(k2, (B, T, EB), dtype=jnp.float32)
    maskA = (jax.random.uniform(k3, (B, T)) > 0.2).astype(jnp.float32)
    maskB = (jax.random.uniform(k4, (B, T)) > 0.2).astype(jnp.float32)

    # "Linear(EA, H)" with bias and "Linear(EB, H)" without bias, stored (emb, hidden).
    wA = jax.random.normal(k5, (EA, H), dtype=jnp.float32) * 0.05
    bA = jax.random.normal(k6, (H,), dtype=jnp.float32) * 0.05
    wB = jax.random.normal(k7, (EB, H), dtype=jnp.float32) * 0.05

    combined, mask = span_rep_assembly(embA, embB, maskA, maskB, wA, bA, wB)
    jax.block_until_ready((combined, mask))

    ref_combined, ref_mask = _reference(embA, embB, maskA, maskB, wA, bA, wB)
    P = T * (T + 1) // 2
    assert combined.shape == (B, P, H)
    assert mask.shape == (B, P)
    assert jnp.allclose(combined, ref_combined, atol=1e-4, rtol=1e-4)
    assert jnp.allclose(mask, ref_mask, atol=1e-6)

    print("KERNEL_OK")
</pallas_src>

<mosaic_0001>
module attributes {stable_mosaic.version = 11 : i64} {
  func.func @_span_pack_kernel(%arg0: i32, %arg1: memref<1x8x48xf32, #tpu.memory_space<vmem>>, %arg2: memref<1x8x64xf32, #tpu.memory_space<vmem>>, %arg3: memref<48x32xf32, #tpu.memory_space<vmem>>, %arg4: memref<1x32xf32, #tpu.memory_space<vmem>>, %arg5: memref<64x32xf32, #tpu.memory_space<vmem>>, %arg6: memref<1x36x32xf32, #tpu.memory_space<vmem>>, %arg7: memref<8x32xf32, #tpu.memory_space<vmem>>, %arg8: memref<8x32xf32, #tpu.memory_space<vmem>>) attributes {dimension_semantics = [#tpu.dimension_semantics<parallel>], iteration_bounds = array<i64: 2>, scalar_prefetch = 0 : i64, scratch_operands = 2 : i64, tpu.core_type = #tpu.core_type<tc>, window_params = [{transform_indices = @transform_0, window_bounds = array<i64: 1, 8, 48>}, {transform_indices = @transform_1, window_bounds = array<i64: 1, 8, 64>}, {pipeline_mode = #tpu.pipeline_mode<synchronous>, transform_indices = @transform_2, window_bounds = array<i64: 48, 32>}, {pipeline_mode = #tpu.pipeline_mode<synchronous>, transform_indices = @transform_3, window_bounds = array<i64: 1, 32>}, {pipeline_mode = #tpu.pipeline_mode<synchronous>, transform_indices = @transform_4, window_bounds = array<i64: 64, 32>}, {transform_indices = @transform_5, window_bounds = array<i64: 1, 36, 32>}]} {
    %c0 = arith.constant 0 : index
    %c0_0 = arith.constant 0 : index
    %c0_1 = arith.constant 0 : index
    %0 = vector.load %arg1[%c0, %c0_0, %c0_1] : memref<1x8x48xf32, #tpu.memory_space<vmem>>, vector<1x8x48xf32>
    %1 = vector.shape_cast %0 : vector<1x8x48xf32> to vector<8x48xf32>
    %c0_2 = arith.constant 0 : index
    %c0_3 = arith.constant 0 : index
    %2 = vector.load %arg3[%c0_2, %c0_3] : memref<48x32xf32, #tpu.memory_space<vmem>>, vector<48x32xf32>
    %cst = arith.constant dense<0.000000e+00> : vector<8x32xf32>
    %3 = tpu.matmul %1, %2, %cst {dimension_numbers = #tpu.dot_dimension_numbers<[1], [0], [0], [1], [0, 0, 1, 1], [], []>} : vector<8x48xf32>, vector<48x32xf32>, vector<8x32xf32> -> vector<8x32xf32>
    %c0_4 = arith.constant 0 : index
    %c0_5 = arith.constant 0 : index
    %4 = vector.load %arg4[%c0_4, %c0_5] : memref<1x32xf32, #tpu.memory_space<vmem>>, vector<1x32xf32>
    %5 = vector.broadcast %4 : vector<1x32xf32> to vector<8x32xf32>
    %6 = arith.addf %3, %5 : vector<8x32xf32>
    %c0_6 = arith.constant 0 : index
    %c0_7 = arith.constant 0 : index
    %c0_8 = arith.constant 0 : index
    %7 = vector.load %arg2[%c0_6, %c0_7, %c0_8] : memref<1x8x64xf32, #tpu.memory_space<vmem>>, vector<1x8x64xf32>
    %8 = vector.shape_cast %7 : vector<1x8x64xf32> to vector<8x64xf32>
    %c0_9 = arith.constant 0 : index
    %c0_10 = arith.constant 0 : index
    %9 = vector.load %arg5[%c0_9, %c0_10] : memref<64x32xf32, #tpu.memory_space<vmem>>, vector<64x32xf32>
    %cst_11 = arith.constant dense<0.000000e+00> : vector<8x32xf32>
    %10 = tpu.matmul %8, %9, %cst_11 {dimension_numbers = #tpu.dot_dimension_numbers<[1], [0], [0], [1], [0, 0, 1, 1], [], []>} : vector<8x64xf32>, vector<64x32xf32>, vector<8x32xf32> -> vector<8x32xf32>
    %c0_12 = arith.constant 0 : index
    %c0_13 = arith.constant 0 : index
    %11 = vector.load %arg7[%c0_12, %c0_13] : memref<8x32xf32, #tpu.memory_space<vmem>>, vector<8x32xf32>
    tpu.vector_store %arg7[%c0_12, %c0_13], %6 {strides = array<i32>} : memref<8x32xf32, #tpu.memory_space<vmem>>, vector<8x32xf32>,
    %c0_14 = arith.constant 0 : index
    %c0_15 = arith.constant 0 : index
    %12 = vector.load %arg8[%c0_14, %c0_15] : memref<8x32xf32, #tpu.memory_space<vmem>>, vector<8x32xf32>
    tpu.vector_store %arg8[%c0_14, %c0_15], %10 {strides = array<i32>} : memref<8x32xf32, #tpu.memory_space<vmem>>, vector<8x32xf32>,
    %c0_16 = arith.constant 0 : index
    %c0_17 = arith.constant 0 : index
    %13 = vector.load %arg7[%c0_16, %c0_17] : memref<8x32xf32, #tpu.memory_space<vmem>>, vector<1x32xf32>
    %c0_18 = arith.constant 0 : index
    %c0_19 = arith.constant 0 : index
    %14 = vector.load %arg8[%c0_18, %c0_19] : memref<8x32xf32, #tpu.memory_space<vmem>>, vector<8x32xf32>
    %15 = vector.broadcast %13 : vector<1x32xf32> to vector<8x32xf32>
    %16 = arith.addf %15, %14 : vector<8x32xf32>
    %c0_20 = arith.constant 0 : index
    %c0_21 = arith.constant 0 : index
    %c0_22 = arith.constant 0 : index
    %17 = vector.load %arg6[%c0_20, %c0_21, %c0_22] : memref<1x36x32xf32, #tpu.memory_space<vmem>>, vector<1x8x32xf32>
    %18 = vector.shape_cast %17 : vector<1x8x32xf32> to vector<8x32xf32>
    %19 = vector.shape_cast %16 : vector<8x32xf32> to vector<1x8x32xf32>
    tpu.vector_store %arg6[%c0_20, %c0_21, %c0_22], %19 {strides = array<i32>} : memref<1x36x32xf32, #tpu.memory_space<vmem>>, vector<1x8x32xf32>,
    %c1 = arith.constant 1 : index
    %c0_23 = arith.constant 0 : index
    %20 = vector.load %arg7[%c1, %c0_23] : memref<8x32xf32, #tpu.memory_space<vmem>>, vector<1x32xf32>
    %c1_24 = arith.constant 1 : index
    %c0_25 = arith.constant 0 : index
    %21 = vector.load %arg8[%c1_24, %c0_25] : memref<8x32xf32, #tpu.memory_space<vmem>>, vector<7x32xf32>
    %22 = vector.broadcast %20 : vector<1x32xf32> to vector<7x32xf32>
    %23 = arith.addf %22, %21 : vector<7x32xf32>
    %c0_26 = arith.constant 0 : index
    %c8 = arith.constant 8 : index
    %c0_27 = arith.constant 0 : index
    %24 = vector.load %arg6[%c0_26, %c8, %c0_27] : memref<1x36x32xf32, #tpu.memory_space<vmem>>, vector<1x7x32xf32>
    %25 = vector.shape_cast %24 : vector<1x7x32xf32> to vector<7x32xf32>
    %26 = vector.shape_cast %23 : vector<7x32xf32> to vector<1x7x32xf32>
    tpu.vector_store %arg6[%c0_26, %c8, %c0_27], %26 {strides = array<i32>} : memref<1x36x32xf32, #tpu.memory_space<vmem>>, vector<1x7x32xf32>,
    %c2 = arith.constant 2 : index
    %c0_28 = arith.constant 0 : index
    %27 = vector.load %arg7[%c2, %c0_28] : memref<8x32xf32, #tpu.memory_space<vmem>>, vector<1x32xf32>
    %c2_29 = arith.constant 2 : index
    %c0_30 = arith.constant 0 : index
    %28 = vector.load %arg8[%c2_29, %c0_30] : memref<8x32xf32, #tpu.memory_space<vmem>>, vector<6x32xf32>
    %29 = vector.broadcast %27 : vector<1x32xf32> to vector<6x32xf32>
    %30 = arith.addf %29, %28 : vector<6x32xf32>
    %c0_31 = arith.constant 0 : index
    %c15 = arith.constant 15 : index
    %c0_32 = arith.constant 0 : index
    %31 = vector.load %arg6[%c0_31, %c15, %c0_32] : memref<1x36x32xf32, #tpu.memory_space<vmem>>, vector<1x6x32xf32>
    %32 = vector.shape_cast %31 : vector<1x6x32xf32> to vector<6x32xf32>
    %33 = vector.shape_cast %30 : vector<6x32xf32> to vector<1x6x32xf32>
    tpu.vector_store %arg6[%c0_31, %c15, %c0_32], %33 {strides = array<i32>} : memref<1x36x32xf32, #tpu.memory_space<vmem>>, vector<1x6x32xf32>,
    %c3 = arith.constant 3 : index
    %c0_33 = arith.constant 0 : index
    %34 = vector.load %arg7[%c3, %c0_33] : memref<8x32xf32, #tpu.memory_space<vmem>>, vector<1x32xf32>
    %c3_34 = arith.constant 3 : index
    %c0_35 = arith.constant 0 : index
    %35 = vector.load %arg8[%c3_34, %c0_35] : memref<8x32xf32, #tpu.memory_space<vmem>>, vector<5x32xf32>
    %36 = vector.broadcast %34 : vector<1x32xf32> to vector<5x32xf32>
    %37 = arith.addf %36, %35 : vector<5x32xf32>
    %c0_36 = arith.constant 0 : index
    %c21 = arith.constant 21 : index
    %c0_37 = arith.constant 0 : index
    %38 = vector.load %arg6[%c0_36, %c21, %c0_37] : memref<1x36x32xf32, #tpu.memory_space<vmem>>, vector<1x5x32xf32>
    %39 = vector.shape_cast %38 : vector<1x5x32xf32> to vector<5x32xf32>
    %40 = vector.shape_cast %37 : vector<5x32xf32> to vector<1x5x32xf32>
    tpu.vector_store %arg6[%c0_36, %c21, %c0_37], %40 {strides = array<i32>} : memref<1x36x32xf32, #tpu.memory_space<vmem>>, vector<1x5x32xf32>,
    %c4 = arith.constant 4 : index
    %c0_38 = arith.constant 0 : index
    %41 = vector.load %arg7[%c4, %c0_38] : memref<8x32xf32, #tpu.memory_space<vmem>>, vector<1x32xf32>
    %c4_39 = arith.constant 4 : index
    %c0_40 = arith.constant 0 : index
    %42 = vector.load %arg8[%c4_39, %c0_40] : memref<8x32xf32, #tpu.memory_space<vmem>>, vector<4x32xf32>
    %43 = vector.broadcast %41 : vector<1x32xf32> to vector<4x32xf32>
    %44 = arith.addf %43, %42 : vector<4x32xf32>
    %c0_41 = arith.constant 0 : index
    %c26 = arith.constant 26 : index
    %c0_42 = arith.constant 0 : index
    %45 = vector.load %arg6[%c0_41, %c26, %c0_42] : memref<1x36x32xf32, #tpu.memory_space<vmem>>, vector<1x4x32xf32>
    %46 = vector.shape_cast %45 : vector<1x4x32xf32> to vector<4x32xf32>
    %47 = vector.shape_cast %44 : vector<4x32xf32> to vector<1x4x32xf32>
    tpu.vector_store %arg6[%c0_41, %c26, %c0_42], %47 {strides = array<i32>} : memref<1x36x32xf32, #tpu.memory_space<vmem>>, vector<1x4x32xf32>,
    %c5 = arith.constant 5 : index
    %c0_43 = arith.constant 0 : index
    %48 = vector.load %arg7[%c5, %c0_43] : memref<8x32xf32, #tpu.memory_space<vmem>>, vector<1x32xf32>
    %c5_44 = arith.constant 5 : index
    %c0_45 = arith.constant 0 : index
    %49 = vector.load %arg8[%c5_44, %c0_45] : memref<8x32xf32, #tpu.memory_space<vmem>>, vector<3x32xf32>
    %50 = vector.broadcast %48 : vector<1x32xf32> to vector<3x32xf32>
    %51 = arith.addf %50, %49 : vector<3x32xf32>
    %c0_46 = arith.constant 0 : index
    %c30 = arith.constant 30 : index
    %c0_47 = arith.constant 0 : index
    %52 = vector.load %arg6[%c0_46, %c30, %c0_47] : memref<1x36x32xf32, #tpu.memory_space<vmem>>, vector<1x3x32xf32>
    %53 = vector.shape_cast %52 : vector<1x3x32xf32> to vector<3x32xf32>
    %54 = vector.shape_cast %51 : vector<3x32xf32> to vector<1x3x32xf32>
    tpu.vector_store %arg6[%c0_46, %c30, %c0_47], %54 {strides = array<i32>} : memref<1x36x32xf32, #tpu.memory_space<vmem>>, vector<1x3x32xf32>,
    %c6 = arith.constant 6 : index
    %c0_48 = arith.constant 0 : index
    %55 = vector.load %arg7[%c6, %c0_48] : memref<8x32xf32, #tpu.memory_space<vmem>>, vector<1x32xf32>
    %c6_49 = arith.constant 6 : index
    %c0_50 = arith.constant 0 : index
    %56 = vector.load %arg8[%c6_49, %c0_50] : memref<8x32xf32, #tpu.memory_space<vmem>>, vector<2x32xf32>
    %57 = vector.broadcast %55 : vector<1x32xf32> to vector<2x32xf32>
    %58 = arith.addf %57, %56 : vector<2x32xf32>
    %c0_51 = arith.constant 0 : index
    %c33 = arith.constant 33 : index
    %c0_52 = arith.constant 0 : index
    %59 = vector.load %arg6[%c0_51, %c33, %c0_52] : memref<1x36x32xf32, #tpu.memory_space<vmem>>, vector<1x2x32xf32>
    %60 = vector.shape_cast %59 : vector<1x2x32xf32> to vector<2x32xf32>
    %61 = vector.shape_cast %58 : vector<2x32xf32> to vector<1x2x32xf32>
    tpu.vector_store %arg6[%c0_51, %c33, %c0_52], %61 {strides = array<i32>} : memref<1x36x32xf32, #tpu.memory_space<vmem>>, vector<1x2x32xf32>,
    %c7 = arith.constant 7 : index
    %c0_53 = arith.constant 0 : index
    %62 = vector.load %arg7[%c7, %c0_53] : memref<8x32xf32, #tpu.memory_space<vmem>>, vector<1x32xf32>
    %c7_54 = arith.constant 7 : index
    %c0_55 = arith.constant 0 : index
    %63 = vector.load %arg8[%c7_54, %c0_55] : memref<8x32xf32, #tpu.memory_space<vmem>>, vector<1x32xf32>
    %64 = arith.addf %62, %63 : vector<1x32xf32>
    %c0_56 = arith.constant 0 : index
    %c35 = arith.constant 35 : index
    %c0_57 = arith.constant 0 : index
    %65 = vector.load %arg6[%c0_56, %c35, %c0_57] : memref<1x36x32xf32, #tpu.memory_space<vmem>>, vector<1x1x32xf32>
    %66 = vector.shape_cast %65 : vector<1x1x32xf32> to vector<1x32xf32>
    %67 = vector.shape_cast %64 : vector<1x32xf32> to vector<1x1x32xf32>
    tpu.vector_store %arg6[%c0_56, %c35, %c0_57], %67 {strides = array<i32>} : memref<1x36x32xf32, #tpu.memory_space<vmem>>, vector<1x1x32xf32>,
    return
  }
  func.func @transform_0(%arg0: i32) -> (i32, i32, i32) {
    %c0_i32 = arith.constant 0 : i32
    %c0_i32_0 = arith.constant 0 : i32
    %c0_i32_1 = arith.constant 0 : i32
    return %arg0, %c0_i32, %c0_i32_0 : i32, i32, i32
  }
  func.func @transform_1(%arg0: i32) -> (i32, i32, i32) {
    %c0_i32 = arith.constant 0 : i32
    %c0_i32_0 = arith.constant 0 : i32
    %c0_i32_1 = arith.constant 0 : i32
    return %arg0, %c0_i32, %c0_i32_0 : i32, i32, i32
  }
  func.func @transform_2(%arg0: i32) -> (i32, i32) {
    %c0_i32 = arith.constant 0 : i32
    %c0_i32_0 = arith.constant 0 : i32
    %c0_i32_1 = arith.constant 0 : i32
    return %c0_i32, %c0_i32_0 : i32, i32
  }
  func.func @transform_3(%arg0: i32) -> (i32, i32) {
    %c0_i32 = arith.constant 0 : i32
    %c0_i32_0 = arith.constant 0 : i32
    %c0_i32_1 = arith.constant 0 : i32
    return %c0_i32, %c0_i32_0 : i32, i32
  }
  func.func @transform_4(%arg0: i32) -> (i32, i32) {
    %c0_i32 = arith.constant 0 : i32
    %c0_i32_0 = arith.constant 0 : i32
    %c0_i32_1 = arith.constant 0 : i32
    return %c0_i32, %c0_i32_0 : i32, i32
  }
  func.func @transform_5(%arg0: i32) -> (i32, i32, i32) {
    %c0_i32 = arith.constant 0 : i32
    %c0_i32_0 = arith.constant 0 : i32
    %c0_i32_1 = arith.constant 0 : i32
    return %arg0, %c0_i32, %c0_i32_0 : i32, i32, i32
  }
}

</mosaic_0001>

<llo_original>
// kernel: tpu_custom_call.1
$region0: #{tpu_custom_call.1}
  #allocation0 [shape = 'u32[]', space=smem, size = 0x4, offset = 0x4, fixed_abs, tag = 'smem constant byte address 0x4 - core index']
  #allocation1 [shape = 'u32[144,128]{1,0:T(1,128)}', space=vmem, size = 0x12000, scoped, tag = 'internal scratch']
  #allocation2 [shape = 'f32[8,32]{1,0:T(8,128)}', space=vmem, size = 0x1000, scoped, tag = 'scratch operand']
  #allocation3 [shape = 'f32[8,32]{1,0:T(8,128)}', space=vmem, size = 0x1000, scoped, tag = 'scratch operand']
  %s0 = inlined_call_operand.vmem [shape: f32[2,8,48], index: 0, kind: input, shape index: {}]
  %s1 = inlined_call_operand.vmem [shape: f32[2,8,64], index: 1, kind: input, shape index: {}]
  %s2 = inlined_call_operand.vmem [shape: f32[48,32], index: 2, kind: input, shape index: {}]
  %s3 = inlined_call_operand.vmem [shape: f32[1,32], index: 3, kind: input, shape index: {}]
  %s4 = inlined_call_operand.vmem [shape: f32[64,32], index: 4, kind: input, shape index: {}]
  %s5 = inlined_call_operand.vmem [shape: f32[2,36,32], index: 5, kind: output, shape index: {}]
  %s6 = sld [smem:[#allocation0]]
  $region53: #{tpu_custom_call.1} parent=0
    _
  %s8 = ssub.s32 1, %s6
  %s9 = scalar_select 0, %s8, %s6
  loop: start=0, step=1, limit=4
  $region2: #{tpu_custom_call.1} parent=0 // loop_pre_header
    _
  $region3: #{tpu_custom_call.1} parent=0 // loop_header
    %s11 = sphi 0, %s15
    %p12 = scmp.ge.s32.totalorder %s11, 4
    %s21 = sphi 0, %s23
    %s24 = sphi 0, %s21
    %s25 = sphi 0, %s24
    %s41 = sphi 0, %s25
    %s47 = sphi 0, %s49
    %s50 = sphi 0, %s47
    %s51 = sphi 0, %s50
    %s67 = sphi 0, %s51
    %s71 = sphi 0, %s71
    %s73 = sphi 0, %s71
    %s74 = sphi 0, %s73
    %s88 = sphi 0, %s74
    %s92 = sphi 0, %s92
    %s94 = sphi 0, %s92
    %s95 = sphi 0, %s94
    %s109 = sphi 0, %s95
    %s113 = sphi 0, %s113
    %s115 = sphi 0, %s113
    %s116 = sphi 0, %s115
    %s130 = sphi 0, %s116
    %s136 = sphi 0, %s138
    %s139 = sphi 0, %s136
    %s140 = sphi 0, %s139
    %s156 = sphi 0, %s140
  $region4: #{tpu_custom_call.1} parent=0 // loop_header_branch
    %14 = sbr.rel (%p12) target = $region8
  $region5: #{tpu_custom_call.1} parent=0 // loop_body
    %s16 = ssub.s32 %s11, 1
    %s17 = ssub.s32 %s11, 2
    %s18 = sadd.s32 %s11, 1
    %s19 = ssub.s32 %s11, %s18
    %p20 = scmp.eq.s32.totalorder %s19, 0
    %s22 = sadd.s32 %s21, 1
    %s23 = scalar_select %p20, %s21, %s22
    %p26 = pneg %p20
    %p27 = scmp.eq.s32.totalorder %s11, 1
    %p28 = por %p26, %p27
    %p29 = scmp.ne.s32.totalorder %s21, %s24
    %p30 = scmp.eq.s32.totalorder %s11, 0
    %p31 = por %p29, %p30
    %p32 = scmp.ne.s32.totalorder %s21, %s24
    %p33 = scmp.eq.s32.totalorder %s16, 1
    %p34 = por %p32, %p33
    %p35 = scmp.ne.s32.totalorder %s24, %s25
    %p36 = scmp.eq.s32.totalorder %s16, 0
    %p37 = por %p35, %p36
    %p38 = scmp.ne.s32.totalorder %s24, %s25
    %p39 = scmp.eq.s32.totalorder %s17, 1
    %p40 = por %p38, %p39
    %p42 = scmp.ne.s32.totalorder %s25, %s41
    %p43 = scmp.eq.s32.totalorder %s17, 0
    %p44 = por %p42, %p43
    %s45 = ssub.s32 %s11, %s18
    %p46 = scmp.eq.s32.totalorder %s45, 0
    %s48 = sadd.s32 %s47, 1
    %s49 = scalar_select %p46, %s47, %s48
    %p52 = pneg %p46
    %p53 = scmp.eq.s32.totalorder %s11, 1
    %p54 = por %p52, %p53
    %p55 = scmp.ne.s32.totalorder %s47, %s50
    %p56 = scmp.eq.s32.totalorder %s11, 0
    %p57 = por %p55, %p56
    %p58 = scmp.ne.s32.totalorder %s47, %s50
    %p59 = scmp.eq.s32.totalorder %s16, 1
    %p60 = por %p58, %p59
    %p61 = scmp.ne.s32.totalorder %s50, %s51
    %p62 = scmp.eq.s32.totalorder %s16, 0
    %p63 = por %p61, %p62
    %p64 = scmp.ne.s32.totalorder %s50, %s51
    %p65 = scmp.eq.s32.totalorder %s17, 1
    %p66 = por %p64, %p65
    %p68 = scmp.ne.s32.totalorder %s51, %s67
    %p69 = scmp.eq.s32.totalorder %s17, 0
    %p70 = por %p68, %p69
    %s72 = sadd.s32 %s71, 1
    %p75 = scmp.eq.s32.totalorder %s11, 1
    %p76 = scmp.ne.s32.totalorder %s71, %s73
    %p77 = scmp.eq.s32.totalorder %s11, 0
    %p78 = por %p76, %p77
    %p79 = scmp.ne.s32.totalorder %s71, %s73
    %p80 = scmp.eq.s32.totalorder %s16, 1
    %p81 = por %p79, %p80
    %p82 = scmp.ne.s32.totalorder %s73, %s74
    %p83 = scmp.eq.s32.totalorder %s16, 0
    %p84 = por %p82, %p83
    %p85 = scmp.ne.s32.totalorder %s73, %s74
    %p86 = scmp.eq.s32.totalorder %s17, 1
    %p87 = por %p85, %p86
    %p89 = scmp.ne.s32.totalorder %s74, %s88
    %p90 = scmp.eq.s32.totalorder %s17, 0
    %p91 = por %p89, %p90
    %s93 = sadd.s32 %s92, 1
    %p96 = scmp.eq.s32.totalorder %s11, 1
    %p97 = scmp.ne.s32.totalorder %s92, %s94
    %p98 = scmp.eq.s32.totalorder %s11, 0
    %p99 = por %p97, %p98
    %p100 = scmp.ne.s32.totalorder %s92, %s94
    %p101 = scmp.eq.s32.totalorder %s16, 1
    %p102 = por %p100, %p101
    %p103 = scmp.ne.s32.totalorder %s94, %s95
    %p104 = scmp.eq.s32.totalorder %s16, 0
    %p105 = por %p103, %p104
    %p106 = scmp.ne.s32.totalorder %s94, %s95
    %p107 = scmp.eq.s32.totalorder %s17, 1
    %p108 = por %p106, %p107
    %p110 = scmp.ne.s32.totalorder %s95, %s109
    %p111 = scmp.eq.s32.totalorder %s17, 0
    %p112 = por %p110, %p111
    %s114 = sadd.s32 %s113, 1
    %p117 = scmp.eq.s32.totalorder %s11, 1
    %p118 = scmp.ne.s32.totalorder %s113, %s115
    %p119 = scmp.eq.s32.totalorder %s11, 0
    %p120 = por %p118, %p119
    %p121 = scmp.ne.s32.totalorder %s113, %s115
    %p122 = scmp.eq.s32.totalorder %s16, 1
    %p123 = por %p121, %p122
    %p124 = scmp.ne.s32.totalorder %s115, %s116
    %p125 = scmp.eq.s32.totalorder %s16, 0
    %p126 = por %p124, %p125
    %p127 = scmp.ne.s32.totalorder %s115, %s116
    %p128 = scmp.eq.s32.totalorder %s17, 1
    %p129 = por %p127, %p128
    %p131 = scmp.ne.s32.totalorder %s116, %s130
    %p132 = scmp.eq.s32.totalorder %s17, 0
    %p133 = por %p131, %p132
    %s134 = ssub.s32 %s11, %s18
    %p135 = scmp.eq.s32.totalorder %s134, 0
    %s137 = sadd.s32 %s136, 1
    %s138 = scalar_select %p135, %s136, %s137
    %p141 = pneg %p135
    %p142 = scmp.eq.s32.totalorder %s11, 1
    %p143 = por %p141, %p142
    %p144 = scmp.ne.s32.totalorder %s136, %s139
    %p145 = scmp.eq.s32.totalorder %s11, 0
    %p146 = por %p144, %p145
    %p147 = scmp.ne.s32.totalorder %s136, %s139
    %p148 = scmp.eq.s32.totalorder %s16, 1
    %p149 = por %p147, %p148
    %p150 = scmp.ne.s32.totalorder %s139, %s140
    %p151 = scmp.eq.s32.totalorder %s16, 0
    %p152 = por %p150, %p151
    %p153 = scmp.ne.s32.totalorder %s139, %s140
    %p154 = scmp.eq.s32.totalorder %s17, 1
    %p155 = por %p153, %p154
    %p157 = scmp.ne.s32.totalorder %s140, %s156
    %p158 = scmp.eq.s32.totalorder %s17, 0
    %p159 = por %p157, %p158
    %p160 = scmp.le.s32.totalorder 1, %s11
    %p161 = scmp.lt.s32.totalorder %s11, 3
    %p162 = pnand %p160, %p161
    %p163 = pneg %p162
    // Predicated region
    $region9: #{tpu_custom_call.1} parent=5 // pred_check
      _
    $region10: #{tpu_custom_call.1} parent=5 // pred_check_branch
      %165 = sbr.rel (%p162) target = $region12
    $region11: #{tpu_custom_call.1} parent=5 // pred_region
      %s166 = ssub.s32 %s11, 1
      // Predicated region
      $region13: #{tpu_custom_call.1} parent=11 // pred_check
        %p167 = pneg %p84
      $region14: #{tpu_custom_call.1} parent=11 // pred_check_branch
        %169 = sbr.rel (%p167) target = $region16
      $region15: #{tpu_custom_call.1} parent=11 // pred_region
        _
      $region16: #{tpu_custom_call.1} parent=11 // pred_fallthru
        _
      // Predicated region
      $region17: #{tpu_custom_call.1} parent=11 // pred_check
        %p170 = pneg %p105
      $region18: #{tpu_custom_call.1} parent=11 // pred_check_branch
        %172 = sbr.rel (%p170) target = $region20
      $region19: #{tpu_custom_call.1} parent=11 // pred_region
        _
      $region20: #{tpu_custom_call.1} parent=11 // pred_fallthru
        _
      // Predicated region
      $region21: #{tpu_custom_call.1} parent=11 // pred_check
        %p173 = pneg %p126
      $region22: #{tpu_custom_call.1} parent=11 // pred_check_branch
        %175 = sbr.rel (%p173) target = $region24
      $region23: #{tpu_custom_call.1} parent=11 // pred_region
        _
      $region24: #{tpu_custom_call.1} parent=11 // pred_fallthru
        _
    $region12: #{tpu_custom_call.1} parent=5 // pred_fallthru
      _
    %p176 = scmp.lt.s32.totalorder %s11, 2
    // Predicated region
    $region25: #{tpu_custom_call.1} parent=5 // pred_check
      %p177 = pneg %p176
    $region26: #{tpu_custom_call.1} parent=5 // pred_check_branch
      %179 = sbr.rel (%p177) target = $region28
    $region27: #{tpu_custom_call.1} parent=5 // pred_region
      // Predicated region
      $region29: #{tpu_custom_call.1} parent=27 // pred_check
        %p180 = pneg %p31
      $region30: #{tpu_custom_call.1} parent=27 // pred_check_branch
        %182 = sbr.rel (%p180) target = $region32
      $region31: #{tpu_custom_call.1} parent=27 // pred_region
        %p183 = scmp.lt.s32.totalorder %s11, 1
        %s184 = scalar_select %p183, %s11, 1
        %s185 = smul.addr %s184, 8
        %s186 = scalar_lea.vmem %s0, %s185
      $region32: #{tpu_custom_call.1} parent=27 // pred_fallthru
        _
      // Predicated region
      $region33: #{tpu_custom_call.1} parent=27 // pred_check
        %p187 = pneg %p57
      $region34: #{tpu_custom_call.1} parent=27 // pred_check_branch
        %189 = sbr.rel (%p187) target = $region36
      $region35: #{tpu_custom_call.1} parent=27 // pred_region
        %p190 = scmp.lt.s32.totalorder %s11, 1
        %s191 = scalar_select %p190, %s11, 1
        %s192 = smul.addr %s191, 8
        %s193 = scalar_lea.vmem %s1, %s192
      $region36: #{tpu_custom_call.1} parent=27 // pred_fallthru
        _
    $region28: #{tpu_custom_call.1} parent=5 // pred_fallthru
      _
    %p194 = scmp.le.s32.totalorder 1, %s11
    %p195 = scmp.lt.s32.totalorder %s11, 3
    %p196 = pnand %p194, %p195
    %p197 = pneg %p196
    // Predicated region
    $region37: #{tpu_custom_call.1} parent=5 // pred_check
      _
    $region38: #{tpu_custom_call.1} parent=5 // pred_check_branch
      %199 = sbr.rel (%p196) target = $region40
    $region39: #{tpu_custom_call.1} parent=5 // pred_region
      %s200 = ssub.s32 %s11, 1
      %p201 = scmp.lt.s32.totalorder %s16, 1
      %s202 = scalar_select %p201, %s16, 1
      %s203 = smul.addr %s202, 8
      %s204 = scalar_lea.vmem %s0, %s203
      %p205 = pneg %p37
      %p206 = pneg %p34
      %p207 = scmp.lt.s32.totalorder %s16, 1
      %s208 = scalar_select %p207, %s16, 1
      %s209 = smul.addr %s208, 8
      %s210 = scalar_lea.vmem %s1, %s209
      %p211 = pneg %p63
      %p212 = pneg %p60
      %p213 = pneg %p84
      %p214 = pneg %p81
      %p215 = pneg %p105
      %p216 = pneg %p102
      %p217 = pneg %p126
      %p218 = pneg %p123
      %p219 = pneg %p152
      %p220 = pneg %p149
      %p221 = scmp.lt.s32.totalorder %s16, 1
      %s222 = scalar_select %p221, %s16, 1
      %s223 = smul.addr %s222, 5
      %s224 = smul.addr %s223, 8
      %s225 = scalar_lea.vmem %s5, %s224
      %p226 = scmp.lt.s32.totalorder %s16, 1
      %s227 = scalar_select %p226, %s16, 1
      %s228 = smul.addr %s227, 8
      %s229 = scalar_lea.vmem %s0, %s228
      %p230 = scmp.lt.s32.totalorder %s16, 1
      %s231 = scalar_select %p230, %s16, 1
      %s232 = smul.addr %s231, 8
      %s233 = scalar_lea.vmem %s1, %s232
      %p234 = scmp.lt.s32.totalorder %s16, 1
      %s235 = scalar_select %p234, %s16, 1
      %s236 = smul.addr %s235, 5
      %s237 = smul.addr %s236, 8
      %s238 = scalar_lea.vmem %s5, %s237
      %v239 = vld [vmem:[%s229] sm:$0xff]
      %v240 = vld [vmem:[%s2] sm:$0xff]
      %v241 = vld [vmem:[%s2 + $0x8] sm:$0xff]
      %v242 = vld [vmem:[%s2 + $0x10] sm:$0xff]
      %v243 = vld [vmem:[%s2 + $0x18] sm:$0xff]
      %v244 = vld [vmem:[%s2 + $0x20] sm:$0xff]
      %v245 = vld [vmem:[%s2 + $0x28] sm:$0xff]
      %v246 = vld [vmem:[%s3] sm:$0x1]
      %v248 = vlaneseq
      %v249 = vshrl.u32 %v248, 7
      %v250 = vsub.s32 0, %v249
      %v251 = vrot.slane %v246, %v250
      %vm253 = vcmask 392192
      %v255 = vsel %vm253, %v239, 0
      %257 = vmatprep.subr.mxu0 0.0
      %258 = vmatpush1.msra.mxu0 %v240
      %259 = vmatprep.subr.mxu0 0.0
      %260 = vmatpush1.msra.mxu0 %v241
      %261 = vmatprep.subr.mxu0 0.0
      %262 = vmatpush1.msra.mxu0 %v242
      %263 = vmatprep.subr.mxu0 0.0
      %264 = vmatpush1.msra.mxu0 %v243
      %265 = vmatprep.subr.mxu0 0.0
      %266 = vmatpush1.msra.mxu0 %v244
      %267 = vmatprep.subr.mxu0 0.0
      %268 = vmatpush1.msra.mxu0 %v245
      %269 = vmatprep.subr.mxu0 0.0
      %270 = vmatpush1.msra.mxu0 0.0
      %271 = vmatprep.subr.mxu0 0.0
      %272 = vmatpush1.msra.mxu0 0.0
      %273 = vmatprep.subr.mxu0 0.0
      %274 = vmatpush1.msra.mxu0 0.0
      %275 = vmatprep.subr.mxu0 0.0
      %276 = vmatpush1.msra.mxu0 0.0
      %277 = vmatprep.subr.mxu0 0.0
      %278 = vmatpush1.msra.mxu0 0.0
      %279 = vmatprep.subr.mxu0 0.0
      %280 = vmatpush1.msra.mxu0 0.0
      %281 = vmatprep.subr.mxu0 0.0
      %282 = vmatpush1.msra.mxu0 0.0
      %283 = vmatprep.subr.mxu0 0.0
      %284 = vmatpush1.msra.mxu0 0.0
      %285 = vmatprep.subr.mxu0 0.0
      %286 = vmatpush1.msra.mxu0 0.0
      %287 = vmatprep.subr.mxu0 0.0
      %288 = vmatpush1.msra.mxu0 0.0
      %289 = vmatprep.subr.mxu0 0.0
      %290 = vmatpush1.msra.mxu0 0.0
      %291 = vmatprep.subr.mxu0 0.0
      %292 = vmatpush1.msra.mxu0 0.0
      %293 = vmatprep.subr.mxu0 0.0
      %294 = vmatpush1.msra.mxu0 0.0
      %295 = vmatprep.subr.mxu0 0.0
      %296 = vmatpush1.msra.mxu0 0.0
      %297 = vmatprep.subr.mxu0 0.0
      %298 = vmatpush1.msra.mxu0 0.0
      %299 = vmatprep.subr.mxu0 0.0
      %300 = vmatpush1.msra.mxu0 0.0
      %301 = vmatprep.subr.mxu0 0.0
      %302 = vmatpush1.msra.mxu0 0.0
      %303 = vmatprep.subr.mxu0 0.0
      %304 = vmatpush1.msra.mxu0 0.0
      %305 = vmatprep.subr.mxu0 0.0
      %306 = vmatpush1.msra.mxu0 0.0
      %307 = vmatprep.subr.mxu0 0.0
      %308 = vmatpush1.msra.mxu0 0.0
      %309 = vmatprep.subr.mxu0 0.0
      %310 = vmatpush1.msra.mxu0 0.0
      %311 = vmatprep.subr.mxu0 0.0
      %312 = vmatpush1.msra.mxu0 0.0
      %313 = vmatprep.subr.mxu0 0.0
      %314 = vmatpush1.msra.mxu0 0.0
      %315 = vmatprep.subr.mxu0 0.0
      %316 = vmatpush1.msra.mxu0 0.0
      %317 = vmatprep.subr.mxu0 0.0
      %318 = vmatpush1.msra.mxu0 0.0
      %319 = vmatprep.subr.mxu0 0.0
      %320 = vmatpush1.msra.mxu0 0.0
      %321 = vmatprep.mubr.f32.mxu0 0.0
      %322 = vmatmul.mubr.f32.gmra.mrb[0].mxu0 %v255
      %v323 = vpop.f32.mrb[0].mxu0
      %v324 = vadd.f32 %v251, %v323
      %v325 = vpop.f32.mrb[0].mxu0
      %326 = vdwg.mxu0
      %v327 = vld [vmem:[%s233] sm:$0xff]
      %v328 = vld [vmem:[%s4] sm:$0xff]
      %v329 = vld [vmem:[%s4 + $0x8] sm:$0xff]
      %v330 = vld [vmem:[%s4 + $0x10] sm:$0xff]
      %v331 = vld [vmem:[%s4 + $0x18] sm:$0xff]
      %v332 = vld [vmem:[%s4 + $0x20] sm:$0xff]
      %v333 = vld [vmem:[%s4 + $0x28] sm:$0xff]
      %v334 = vld [vmem:[%s4 + $0x30] sm:$0xff]
      %v335 = vld [vmem:[%s4 + $0x38] sm:$0xff]
      %vm336 = vcmask 523264
      %v338 = vsel %vm336, %v327, 0
      %340 = vmatprep.subr.mxu0 0.0
      %341 = vmatpush1.msra.mxu0 %v328
      %342 = vmatprep.subr.mxu0 0.0
      %343 = vmatpush1.msra.mxu0 %v329
      %344 = vmatprep.subr.mxu0 0.0
      %345 = vmatpush1.msra.mxu0 %v330
      %346 = vmatprep.subr.mxu0 0.0
      %347 = vmatpush1.msra.mxu0 %v331
      %348 = vmatprep.subr.mxu0 0.0
      %349 = vmatpush1.msra.mxu0 %v332
      %350 = vmatprep.subr.mxu0 0.0
      %351 = vmatpush1.msra.mxu0 %v333
      %352 = vmatprep.subr.mxu0 0.0
      %353 = vmatpush1.msra.mxu0 %v334
      %354 = vmatprep.subr.mxu0 0.0
      %355 = vmatpush1.msra.mxu0 %v335
      %356 = vmatprep.subr.mxu0 0.0
      %357 = vmatpush1.msra.mxu0 0.0
      %358 = vmatprep.subr.mxu0 0.0
      %359 = vmatpush1.msra.mxu0 0.0
      %360 = vmatprep.subr.mxu0 0.0
      %361 = vmatpush1.msra.mxu0 0.0
      %362 = vmatprep.subr.mxu0 0.0
      %363 = vmatpush1.msra.mxu0 0.0
      %364 = vmatprep.subr.mxu0 0.0
      %365 = vmatpush1.msra.mxu0 0.0
      %366 = vmatprep.subr.mxu0 0.0
      %367 = vmatpush1.msra.mxu0 0.0
      %368 = vmatprep.subr.mxu0 0.0
      %369 = vmatpush1.msra.mxu0 0.0
      %370 = vmatprep.subr.mxu0 0.0
      %371 = vmatpush1.msra.mxu0 0.0
      %372 = vmatprep.subr.mxu0 0.0
      %373 = vmatpush1.msra.mxu0 0.0
      %374 = vmatprep.subr.mxu0 0.0
      %375 = vmatpush1.msra.mxu0 0.0
      %376 = vmatprep.subr.mxu0 0.0
      %377 = vmatpush1.msra.mxu0 0.0
      %378 = vmatprep.subr.mxu0 0.0
      %379 = vmatpush1.msra.mxu0 0.0
      %380 = vmatprep.subr.mxu0 0.0
      %381 = vmatpush1.msra.mxu0 0.0
      %382 = vmatprep.subr.mxu0 0.0
      %383 = vmatpush1.msra.mxu0 0.0
      %384 = vmatprep.subr.mxu0 0.0
      %385 = vmatpush1.msra.mxu0 0.0
      %386 = vmatprep.subr.mxu0 0.0
      %387 = vmatpush1.msra.mxu0 0.0
      %388 = vmatprep.subr.mxu0 0.0
      %389 = vmatpush1.msra.mxu0 0.0
      %390 = vmatprep.subr.mxu0 0.0
      %391 = vmatpush1.msra.mxu0 0.0
      %392 = vmatprep.subr.mxu0 0.0
      %393 = vmatpush1.msra.mxu0 0.0
      %394 = vmatprep.subr.mxu0 0.0
      %395 = vmatpush1.msra.mxu0 0.0
      %396 = vmatprep.subr.mxu0 0.0
      %397 = vmatpush1.msra.mxu0 0.0
      %398 = vmatprep.subr.mxu0 0.0
      %399 = vmatpush1.msra.mxu0 0.0
      %400 = vmatprep.subr.mxu0 0.0
      %401 = vmatpush1.msra.mxu0 0.0
      %402 = vmatprep.subr.mxu0 0.0
      %403 = vmatpush1.msra.mxu0 0.0
      %404 = vmatprep.mubr.f32.mxu0 0.0
      %405 = vmatmul.mubr.f32.gmra.mrb[0].mxu0 %v338
      %v406 = vpop.f32.mrb[0].mxu0
      %v407 = vadd.f32 0.0, %v406
      %v408 = vpop.f32.mrb[0].mxu0
      %409 = vdwg.mxu0
      %vm410 = vcmask 261120
      %411 = vst.msk [vmem:[#allocation2] sm:$0xff] %vm410, %v324
      %412 = vst.msk [vmem:[#allocation3] sm:$0xff] %vm410, %v407
      %v413 = vld [vmem:[#allocation2] sm:$0x1]
      %v414 = vld [vmem:[#allocation3] sm:$0xff]
      %v415 = vlaneseq
      %v416 = vshrl.u32 %v415, 7
      %v417 = vsub.s32 0, %v416
      %v418 = vrot.slane %v413, %v417
      %v419 = vadd.f32 %v418, %v414
      %420 = vst.msk [vmem:[%s238] sm:$0xff] %vm410, %v419
      %v421 = vld [vmem:[#allocation2 + $0x1] sm:$0x1]
      %v422 = vld [vmem:[#allocation3 + $0x1] sm:$0x7f]
      %v423 = vlaneseq
      %v424 = vshrl.u32 %v423, 7
      %v425 = vsub.s32 0, %v424
      %v426 = vrot.slane %v421, %v425
      %v427 = vadd.f32 %v426, %v422
      %vm428 = vcmask 260096
      %429 = vst.msk [vmem:[%s238 + $0x8] sm:$0x7f] %vm428, %v427
      %v430 = vld [vmem:[#allocation2 + $0x2] sm:$0x1]
      %v431 = vld [vmem:[#allocation3 + $0x2] sm:$0x3f]
      %v432 = vlaneseq
      %v433 = vshrl.u32 %v432, 7
      %v434 = vsub.s32 0, %v433
      %v435 = vrot.slane %v430, %v434
      %v436 = vadd.f32 %v435, %v431
      %vm437 = vcmask 259072
      %438 = vst.msk [vmem:[%s238 + $0xf] sm:$0x3f] %vm437, %v436
      %v439 = vld [vmem:[#allocation2 + $0x3] sm:$0x1]
      %v440 = vld [vmem:[#allocation3 + $0x3] sm:$0x1f]
      %v441 = vlaneseq
      %v442 = vshrl.u32 %v441, 7
      %v443 = vsub.s32 0, %v442
      %v444 = vrot.slane %v439, %v443
      %v445 = vadd.f32 %v444, %v440
      %vm446 = vcmask 258048
      %447 = vst.msk [vmem:[%s238 + $0x15] sm:$0x1f] %vm446, %v445
      %v448 = vld [vmem:[#allocation2 + $0x4] sm:$0x1]
      %v449 = vld [vmem:[#allocation3 + $0x4] sm:$0xf]
      %v450 = vlaneseq
      %v451 = vshrl.u32 %v450, 7
      %v452 = vsub.s32 0, %v451
      %v453 = vrot.slane %v448, %v452
      %v454 = vadd.f32 %v453, %v449
      %vm455 = vcmask 257024
      %456 = vst.msk [vmem:[%s238 + $0x1a] sm:$0xf] %vm455, %v454
      %v457 = vld [vmem:[#allocation2 + $0x5] sm:$0x1]
      %v458 = vld [vmem:[#allocation3 + $0x5] sm:$0x7]
      %v459 = vlaneseq
      %v460 = vshrl.u32 %v459, 7
      %v461 = vsub.s32 0, %v460
      %v462 = vrot.slane %v457, %v461
      %v463 = vadd.f32 %v462, %v458
      %vm464 = vcmask 256000
      %465 = vst.msk [vmem:[%s238 + $0x1e] sm:$0x7] %vm464, %v463
      %v466 = vld [vmem:[#allocation2 + $0x6] sm:$0x1]
      %v467 = vld [vmem:[#allocation3 + $0x6] sm:$0x3]
      %v468 = vlaneseq
      %v469 = vshrl.u32 %v468, 7
      %v470 = vsub.s32 0, %v469
      %v471 = vrot.slane %v466, %v470
      %v472 = vadd.f32 %v471, %v467
      %vm473 = vcmask 254976
      %474 = vst.msk [vmem:[%s238 + $0x21] sm:$0x3] %vm473, %v472
      %v475 = vld [vmem:[#allocation2 + $0x7] sm:$0x1]
      %v476 = vld [vmem:[#allocation3 + $0x7] sm:$0x1]
      %v477 = vadd.f32 %v475, %v476
      %vm478 = vcmask 253952
      %479 = vst.msk [vmem:[%s238 + $0x23] sm:$0x1] %vm478, %v477
      %p480 = scmp.lt.s32.totalorder %s16, 1
      %s481 = scalar_select %p480, %s16, 1
      %s482 = smul.addr %s481, 5
      %s483 = smul.addr %s482, 8
      %s484 = scalar_lea.vmem %s5, %s483
      // Predicated region
      $region41: #{tpu_custom_call.1} parent=39 // pred_check
        %p485 = pneg %p149
      $region42: #{tpu_custom_call.1} parent=39 // pred_check_branch
        %487 = sbr.rel (%p485) target = $region44
      $region43: #{tpu_custom_call.1} parent=39 // pred_region
        _
      $region44: #{tpu_custom_call.1} parent=39 // pred_fallthru
        _
    $region40: #{tpu_custom_call.1} parent=5 // pred_fallthru
      _
    %p488 = scmp.le.s32.totalorder 2, %s11
    // Predicated region
    $region45: #{tpu_custom_call.1} parent=5 // pred_check
      %p489 = pneg %p488
    $region46: #{tpu_custom_call.1} parent=5 // pred_check_branch
      %491 = sbr.rel (%p489) target = $region48
    $region47: #{tpu_custom_call.1} parent=5 // pred_region
      %s492 = ssub.s32 %s11, 2
      // Predicated region
      $region49: #{tpu_custom_call.1} parent=47 // pred_check
        %p493 = pneg %p155
      $region50: #{tpu_custom_call.1} parent=47 // pred_check_branch
        %495 = sbr.rel (%p493) target = $region52
      $region51: #{tpu_custom_call.1} parent=47 // pred_region
        %p496 = scmp.lt.s32.totalorder %s17, 1
        %s497 = scalar_select %p496, %s17, 1
        %s498 = smul.addr %s497, 5
        %s499 = smul.addr %s498, 8
        %s500 = scalar_lea.vmem %s5, %s499
      $region52: #{tpu_custom_call.1} parent=47 // pred_fallthru
        _
    $region48: #{tpu_custom_call.1} parent=5 // pred_fallthru
      _
  $region6: #{tpu_custom_call.1} parent=0 // loop_footer
    %s15 = sadd.s32 1, %s11
  $region7: #{tpu_custom_call.1} parent=0 // loop_footer_branch
    %10 = sbr.rel target = $region3
  $region8: #{tpu_custom_call.1} parent=0 // loop_exit
    _

</llo_original>
